<compile_context>
chip_gen: v5e
topology: v5e:2x2
jax: 0.10.0
libtpu: 0.0.40
codegen_flags: <defaults>
</compile_context>

<pallas_src>
import jax
import jax.numpy as jnp
from jax.experimental import pallas as pl
from jax.experimental.pallas import tpu as pltpu


BN_EPS = 1e-5


def selection_kernel(x_ref, gs_ref, w1rep_ref, b1_ref, w2t_ref, b2_ref,
                     out_ref, acc_ref):
    # x_ref:     (bc_blk, hw_blk)   streamed activation chunk (any float dtype)
    # gs_ref:    (b_blk, bc_blk)    group-sum matrix (resident)
    # w1rep_ref: (bc_blk, M)        fc1 weight, BN + 1/HW folded, tiled per batch row
    # b1_ref:    (1, M)             fc1 bias with BN folded
    # w2t_ref:   (M, O), b2_ref: (1, O)
    # out_ref:   (b_blk, O)
    # acc_ref:   (bc_blk, 1) f32    running spatial sum for this batch block
    k = pl.program_id(1)

    @pl.when(k == 0)
    def _init():
        acc_ref[...] = jnp.zeros_like(acc_ref)

    # Hot loop: upcast after the DMA (keeps HBM traffic at the input dtype,
    # accumulation always in f32 for v5e) and reduce over the lane (HW) axis.
    acc_ref[...] += jnp.sum(x_ref[...].astype(jnp.float32),
                            axis=-1, keepdims=True)

    @pl.when(k == pl.num_programs(1) - 1)
    def _epilogue():
        acc = acc_ref[...]                                       # (bc_blk, 1) raw sums
        # fc1 (with eval-mode BN and 1/HW folded in): group-sum over the C rows
        # belonging to each batch element, done as a tiny matmul to avoid reshapes.
        h = jnp.dot(gs_ref[...], acc * w1rep_ref[...],
                    preferred_element_type=jnp.float32) + b1_ref[...]   # (b_blk, M)
        h = jnp.maximum(h, 0.0)
        sigma = jnp.dot(h, w2t_ref[...],
                        preferred_element_type=jnp.float32) + b2_ref[...]  # (b_blk, O)
        # BinarizationLayer (eval): (sigma > 0).float()
        out_ref[...] = (sigma > 0.0).astype(out_ref.dtype)


def _pick_hw_block(hw, target=2048):
    """Largest lane-aligned (multiple of 128) block that evenly divides HW."""
    for blk in (4096, 2048, 1024, 512, 256, 128):
        if blk <= target and hw % blk == 0:
            return blk
    return hw  # fall back to the full spatial extent (legal: equals the array dim)


def _pick_b_block(batch, channels, hw_blk, itemsize, budget_bytes=6 << 20):
    """Batch-block size: divides B, keeps b*C sublane-aligned (or covers all of B),
    and keeps each x block under ~6 MiB so 2x double-buffering fits every
    generation's scoped VMEM (incl. v7x's 64 MiB physical / 32 MiB default)."""
    bytes_per_row = hw_blk * itemsize
    best = None
    for b in range(1, batch + 1):
        if batch % b:
            continue
        if (b * channels) % 8 != 0 and b != batch:
            continue
        if b * channels * bytes_per_row <= budget_bytes:
            best = b  # largest divisor that fits the budget wins
    if best is None:
        # Nothing fits the budget; take the smallest legal block instead.
        for b in range(1, batch + 1):
            if batch % b == 0 and ((b * channels) % 8 == 0 or b == batch):
                best = b
                break
    return best


def selection_layer(x_nchw, params, bn_eps=BN_EPS):
    """x_nchw: (B, C, H, W) float.  Returns (B, out_channels) float32 of {0,1}."""
    B, C, H, W = x_nchw.shape
    HW = H * W

    w1, b1 = params["w1"], params["b1"]
    gamma, beta = params["gamma"], params["beta"]
    rmean, rvar = params["running_mean"], params["running_var"]
    w2, b2 = params["w2"], params["b2"]
    M = w1.shape[0]
    O = w2.shape[0]

    hw_blk = _pick_hw_block(HW)
    b_blk = _pick_b_block(B, C, hw_blk, x_nchw.dtype.itemsize)
    bc_blk = b_blk * C
    grid_i = B // b_blk
    grid_k = HW // hw_blk

    # Fold eval-mode BatchNorm and the 1/HW mean into fc1 (mathematically exact).
    scale = (gamma * jax.lax.rsqrt(rvar + bn_eps)).astype(jnp.float32)        # (M,)
    w1f = (w1.T.astype(jnp.float32) * scale[None, :]) / float(HW)             # (C, M)
    b1f = ((b1 - rmean) * scale + beta).reshape(1, M).astype(jnp.float32)     # (1, M)
    w2t = w2.T.astype(jnp.float32)                                            # (M, O)
    b2r = b2.reshape(1, O).astype(jnp.float32)                                # (1, O)

    # Per-batch-block constants so the epilogue works directly on the flat
    # (b_blk*C, 1) pooled sums without any in-kernel reshape:
    #   w1rep[b*C + c, m] = w1f[c, m]      gs[b, b'*C + c] = 1 iff b == b'
    w1rep = jnp.tile(w1f, (b_blk, 1))                                         # (bc_blk, M)
    gs = jnp.repeat(jnp.eye(b_blk, dtype=jnp.float32), C, axis=1)             # (b_blk, bc_blk)

    # Flatten (B, C, H, W) -> (B*C, HW): free metadata reshape, sublane-dense.
    x_flat = x_nchw.reshape(B * C, HW)

    const = lambda i, k: (0, 0)
    out = pl.pallas_call(
        selection_kernel,
        out_shape=jax.ShapeDtypeStruct((grid_i, b_blk, O), jnp.float32),
        grid=(grid_i, grid_k),
        in_specs=[
            pl.BlockSpec((bc_blk, hw_blk), lambda i, k: (i, k)),  # x: streamed/pipelined
            pl.BlockSpec((b_blk, bc_blk), const),                 # group-sum (resident)
            pl.BlockSpec((bc_blk, M), const),                     # folded fc1 weight
            pl.BlockSpec((1, M), const),                          # folded fc1 bias
            pl.BlockSpec((M, O), const),                          # fc2 weight
            pl.BlockSpec((1, O), const),                          # fc2 bias
        ],
        out_specs=pl.BlockSpec((None, b_blk, O), lambda i, k: (i, 0, 0)),
        scratch_shapes=[pltpu.VMEM((bc_blk, 1), jnp.float32)],
        compiler_params=pltpu.CompilerParams(
            dimension_semantics=("parallel", "arbitrary"),
            vmem_limit_bytes=32 * 1024 * 1024,
        ),
    )(x_flat, gs, w1rep, b1f, w2t, b2r)

    return out.reshape(B, O)


def init_params(key, in_channels, out_channels, reduction_rate=2):
    mid = max(out_channels // reduction_rate, 1)
    k1, k2, k3, k4 = jax.random.split(key, 4)
    lim1 = 1.0 / (in_channels ** 0.5)
    lim2 = 1.0 / (mid ** 0.5)
    return {
        "w1": jax.random.uniform(k1, (mid, in_channels), jnp.float32, -lim1, lim1),
        "b1": jax.random.uniform(k2, (mid,), jnp.float32, -lim1, lim1),
        "gamma": jnp.ones((mid,), jnp.float32),
        "beta": jnp.zeros((mid,), jnp.float32),
        "running_mean": jnp.zeros((mid,), jnp.float32),
        "running_var": jnp.ones((mid,), jnp.float32),
        "w2": jax.random.uniform(k3, (out_channels, mid), jnp.float32, -lim2, lim2),
        "b2": jax.random.uniform(k4, (out_channels,), jnp.float32, -lim2, lim2),
    }


if __name__ == "__main__":
    key = jax.random.PRNGKey(0)
    kx, kp = jax.random.split(key)

    B, C, H, W = 2, 4, 16, 16
    out_channels = 8

    x = jax.random.normal(kx, (B, C, H, W), jnp.float32)
    params = init_params(kp, in_channels=C, out_channels=out_channels)

    out = selection_layer(x, params)
    jax.block_until_ready(out)

    # Pure-JAX eval-mode reference (straightforward, unfolded math).
    pooled = jnp.mean(x, axis=(2, 3))
    h = pooled @ params["w1"].T + params["b1"]
    h = (h - params["running_mean"]) / jnp.sqrt(params["running_var"] + BN_EPS)
    h = h * params["gamma"] + params["beta"]
    h = jnp.maximum(h, 0.0)
    sigma = h @ params["w2"].T + params["b2"]
    ref = (sigma > 0.0).astype(jnp.float32)

    assert out.shape == (B, out_channels)
    # Folded BN/mean is exact math but not bit-exact; only tolerate a flip where
    # sigma sits numerically on the threshold.
    ok = (out == ref) | (jnp.abs(sigma) < 1e-5)
    assert bool(jnp.all(ok))
    print("KERNEL_OK")
</pallas_src>

<mosaic_0001>
module attributes {stable_mosaic.version = 11 : i64} {
  func.func @selection_kernel(%arg0: i32, %arg1: i32, %arg2: memref<8x256xf32, #tpu.memory_space<vmem>>, %arg3: memref<2x8xf32, #tpu.memory_space<vmem>>, %arg4: memref<8x4xf32, #tpu.memory_space<vmem>>, %arg5: memref<1x4xf32, #tpu.memory_space<vmem>>, %arg6: memref<4x8xf32, #tpu.memory_space<vmem>>, %arg7: memref<1x8xf32, #tpu.memory_space<vmem>>, %arg8: memref<1x2x8xf32, #tpu.memory_space<vmem>>, %arg9: memref<8x1xf32, #tpu.memory_space<vmem>>) attributes {dimension_semantics = [#tpu.dimension_semantics<parallel>, #tpu.dimension_semantics<arbitrary>], iteration_bounds = array<i64: 1, 1>, scalar_prefetch = 0 : i64, scratch_operands = 1 : i64, tpu.core_type = #tpu.core_type<tc>, window_params = [{transform_indices = @transform_0, window_bounds = array<i64: 8, 256>}, {pipeline_mode = #tpu.pipeline_mode<synchronous>, transform_indices = @transform_1, window_bounds = array<i64: 2, 8>}, {pipeline_mode = #tpu.pipeline_mode<synchronous>, transform_indices = @transform_2, window_bounds = array<i64: 8, 4>}, {pipeline_mode = #tpu.pipeline_mode<synchronous>, transform_indices = @transform_3, window_bounds = array<i64: 1, 4>}, {pipeline_mode = #tpu.pipeline_mode<synchronous>, transform_indices = @transform_4, window_bounds = array<i64: 4, 8>}, {pipeline_mode = #tpu.pipeline_mode<synchronous>, transform_indices = @transform_5, window_bounds = array<i64: 1, 8>}, {transform_indices = @transform_6, window_bounds = array<i64: 1, 2, 8>}]} {
    %c0_i32 = arith.constant 0 : i32
    %0 = arith.cmpi eq, %arg1, %c0_i32 : i32
    %1 = arith.extui %0 : i1 to i32
    %c0_i32_0 = arith.constant 0 : i32
    %2 = arith.cmpi ne, %1, %c0_i32_0 : i32
    scf.if %2 {
      %cst_8 = arith.constant 0.000000e+00 : f32
      %12 = vector.broadcast %cst_8 : f32 to vector<8x1xf32>
      %c0_9 = arith.constant 0 : index
      %c0_10 = arith.constant 0 : index
      %13 = vector.load %arg9[%c0_9, %c0_10] : memref<8x1xf32, #tpu.memory_space<vmem>>, vector<8x1xf32>
      tpu.vector_store %arg9[%c0_9, %c0_10], %12 {strides = array<i32>} : memref<8x1xf32, #tpu.memory_space<vmem>>, vector<8x1xf32>,
    } else {
    }
    %c0 = arith.constant 0 : index
    %c0_1 = arith.constant 0 : index
    %3 = vector.load %arg9[%c0, %c0_1] : memref<8x1xf32, #tpu.memory_space<vmem>>, vector<8x1xf32>
    %c0_2 = arith.constant 0 : index
    %c0_3 = arith.constant 0 : index
    %4 = vector.load %arg2[%c0_2, %c0_3] : memref<8x256xf32, #tpu.memory_space<vmem>>, vector<8x256xf32>
    %cst = arith.constant dense<0.000000e+00> : vector<8xf32>
    %5 = vector.multi_reduction <add>, %4, %cst [1] : vector<8x256xf32> to vector<8xf32>
    %6 = vector.shape_cast %5 : vector<8xf32> to vector<8x1xf32>
    %7 = arith.addf %3, %6 : vector<8x1xf32>
    %c0_4 = arith.constant 0 : index
    %c0_5 = arith.constant 0 : index
    %8 = vector.load %arg9[%c0_4, %c0_5] : memref<8x1xf32, #tpu.memory_space<vmem>>, vector<8x1xf32>
    tpu.vector_store %arg9[%c0_4, %c0_5], %7 {strides = array<i32>} : memref<8x1xf32, #tpu.memory_space<vmem>>, vector<8x1xf32>,
    %c0_i32_6 = arith.constant 0 : i32
    %9 = arith.cmpi eq, %arg1, %c0_i32_6 : i32
    %10 = arith.extui %9 : i1 to i32
    %c0_i32_7 = arith.constant 0 : i32
    %11 = arith.cmpi ne, %10, %c0_i32_7 : i32
    scf.if %11 {
      %c0_8 = arith.constant 0 : index
      %c0_9 = arith.constant 0 : index
      %12 = vector.load %arg9[%c0_8, %c0_9] : memref<8x1xf32, #tpu.memory_space<vmem>>, vector<8x1xf32>
      %c0_10 = arith.constant 0 : index
      %c0_11 = arith.constant 0 : index
      %13 = vector.load %arg3[%c0_10, %c0_11] : memref<2x8xf32, #tpu.memory_space<vmem>>, vector<2x8xf32>
      %c0_12 = arith.constant 0 : index
      %c0_13 = arith.constant 0 : index
      %14 = vector.load %arg4[%c0_12, %c0_13] : memref<8x4xf32, #tpu.memory_space<vmem>>, vector<8x4xf32>
      %15 = vector.broadcast %12 : vector<8x1xf32> to vector<8x4xf32>
      %16 = arith.mulf %15, %14 : vector<8x4xf32>
      %cst_14 = arith.constant dense<0.000000e+00> : vector<2x4xf32>
      %17 = tpu.matmul %13, %16, %cst_14 {dimension_numbers = #tpu.dot_dimension_numbers<[1], [0], [0], [1], [0, 0, 1, 1], [], []>} : vector<2x8xf32>, vector<8x4xf32>, vector<2x4xf32> -> vector<2x4xf32>
      %c0_15 = arith.constant 0 : index
      %c0_16 = arith.constant 0 : index
      %18 = vector.load %arg5[%c0_15, %c0_16] : memref<1x4xf32, #tpu.memory_space<vmem>>, vector<1x4xf32>
      %19 = vector.broadcast %18 : vector<1x4xf32> to vector<2x4xf32>
      %20 = arith.addf %17, %19 : vector<2x4xf32>
      %cst_17 = arith.constant 0.000000e+00 : f32
      %21 = vector.broadcast %cst_17 : f32 to vector<2x4xf32>
      %22 = arith.maximumf %20, %21 : vector<2x4xf32>
      %c0_18 = arith.constant 0 : index
      %c0_19 = arith.constant 0 : index
      %23 = vector.load %arg6[%c0_18, %c0_19] : memref<4x8xf32, #tpu.memory_space<vmem>>, vector<4x8xf32>
      %cst_20 = arith.constant dense<0.000000e+00> : vector<2x8xf32>
      %24 = tpu.matmul %22, %23, %cst_20 {dimension_numbers = #tpu.dot_dimension_numbers<[1], [0], [0], [1], [0, 0, 1, 1], [], []>} : vector<2x4xf32>, vector<4x8xf32>, vector<2x8xf32> -> vector<2x8xf32>
      %c0_21 = arith.constant 0 : index
      %c0_22 = arith.constant 0 : index
      %25 = vector.load %arg7[%c0_21, %c0_22] : memref<1x8xf32, #tpu.memory_space<vmem>>, vector<1x8xf32>
      %26 = vector.broadcast %25 : vector<1x8xf32> to vector<2x8xf32>
      %27 = arith.addf %24, %26 : vector<2x8xf32>
      %cst_23 = arith.constant 0.000000e+00 : f32
      %28 = vector.broadcast %cst_23 : f32 to vector<2x8xf32>
      %29 = arith.cmpf ogt, %27, %28 : vector<2x8xf32>
      %30 = arith.extui %29 : vector<2x8xi1> to vector<2x8xi32>
      %31 = arith.sitofp %30 : vector<2x8xi32> to vector<2x8xf32>
      %c0_24 = arith.constant 0 : index
      %c0_25 = arith.constant 0 : index
      %c0_26 = arith.constant 0 : index
      %32 = vector.load %arg8[%c0_24, %c0_25, %c0_26] : memref<1x2x8xf32, #tpu.memory_space<vmem>>, vector<1x2x8xf32>
      %33 = vector.shape_cast %32 : vector<1x2x8xf32> to vector<2x8xf32>
      %34 = vector.shape_cast %31 : vector<2x8xf32> to vector<1x2x8xf32>
      tpu.vector_store %arg8[%c0_24, %c0_25, %c0_26], %34 {strides = array<i32>} : memref<1x2x8xf32, #tpu.memory_space<vmem>>, vector<1x2x8xf32>,
    } else {
    }
    return
  }
  func.func @transform_0(%arg0: i32, %arg1: i32) -> (i32, i32) {
    %c0_i32 = arith.constant 0 : i32
    return %arg0, %arg1 : i32, i32
  }
  func.func @transform_1(%arg0: i32, %arg1: i32) -> (i32, i32) {
    %c0_i32 = arith.constant 0 : i32
    %c0_i32_0 = arith.constant 0 : i32
    %c0_i32_1 = arith.constant 0 : i32
    return %c0_i32, %c0_i32_0 : i32, i32
  }
  func.func @transform_2(%arg0: i32, %arg1: i32) -> (i32, i32) {
    %c0_i32 = arith.constant 0 : i32
    %c0_i32_0 = arith.constant 0 : i32
    %c0_i32_1 = arith.constant 0 : i32
    return %c0_i32, %c0_i32_0 : i32, i32
  }
  func.func @transform_3(%arg0: i32, %arg1: i32) -> (i32, i32) {
    %c0_i32 = arith.constant 0 : i32
    %c0_i32_0 = arith.constant 0 : i32
    %c0_i32_1 = arith.constant 0 : i32
    return %c0_i32, %c0_i32_0 : i32, i32
  }
  func.func @transform_4(%arg0: i32, %arg1: i32) -> (i32, i32) {
    %c0_i32 = arith.constant 0 : i32
    %c0_i32_0 = arith.constant 0 : i32
    %c0_i32_1 = arith.constant 0 : i32
    return %c0_i32, %c0_i32_0 : i32, i32
  }
  func.func @transform_5(%arg0: i32, %arg1: i32) -> (i32, i32) {
    %c0_i32 = arith.constant 0 : i32
    %c0_i32_0 = arith.constant 0 : i32
    %c0_i32_1 = arith.constant 0 : i32
    return %c0_i32, %c0_i32_0 : i32, i32
  }
  func.func @transform_6(%arg0: i32, %arg1: i32) -> (i32, i32, i32) {
    %c0_i32 = arith.constant 0 : i32
    %c0_i32_0 = arith.constant 0 : i32
    %c0_i32_1 = arith.constant 0 : i32
    return %arg0, %c0_i32, %c0_i32_0 : i32, i32, i32
  }
}

</mosaic_0001>

<llo_original>
// kernel: tpu_custom_call.1
$region0: #{tpu_custom_call.1}
  #allocation0 [shape = 'u32[]', space=smem, size = 0x4, offset = 0x4, fixed_abs, tag = 'smem constant byte address 0x4 - core index']
  #allocation1 [shape = 'u32[72,128]{1,0:T(1,128)}', space=vmem, size = 0x9000, scoped, tag = 'internal scratch']
  #allocation2 [shape = 'f32[8,1]{1,0:T(8,128)}', space=vmem, size = 0x1000, scoped, tag = 'scratch operand']
  %s0 = inlined_call_operand.hbm [shape: f32[8,256], index: 0, kind: input, shape index: {}]
  %s1 = inlined_call_operand.vmem [shape: f32[2,8], index: 1, kind: input, shape index: {}]
  %s2 = inlined_call_operand.vmem [shape: f32[8,4], index: 2, kind: input, shape index: {}]
  %s3 = inlined_call_operand.vmem [shape: f32[1,4], index: 3, kind: input, shape index: {}]
  %s4 = inlined_call_operand.vmem [shape: f32[4,8], index: 4, kind: input, shape index: {}]
  %s5 = inlined_call_operand.vmem [shape: f32[1,8], index: 5, kind: input, shape index: {}]
  %s6 = inlined_call_operand.hbm [shape: f32[1,2,8], index: 6, kind: output, shape index: {}]
  %s7 = sld [smem:[#allocation0]]
  $region46: #{tpu_custom_call.1} parent=0
    _
  %s9 = ssub.s32 1, %s7
  %s10 = scalar_select 0, %s9, %s7
  $region1: #{tpu_custom_call.1} parent=0
    #allocation3 [shape = 'u8[8192]{0}', space=vmem, size = 0x2000, scoped, tag = 'input window, operand 0, single buffered']
    #allocation4 [shape = 's32[1]{0}', space=sflag, size = 0x4, scoped, tag = 'scoped memory for tpu_custom_call.1']
    #allocation5 [shape = 's32[1]{0}', space=sflag, size = 0x4, scoped, tag = 'scoped memory for tpu_custom_call.1']
    #allocation6 [shape = 'u8[1024]{0}', space=vmem, size = 0x400, scoped, tag = 'output window, operand 0, single buffered']
    %11 = vsyncpa [#allocation4], 0
    %12 = vsyncpa [#allocation5], 0
    // Predicated region
    $region2: #{tpu_custom_call.1} parent=1 // pred_check
      _
    $region3: #{tpu_custom_call.1} parent=1 // pred_check_branch
      %14 = sbr.rel (0) target = $region5
    $region4: #{tpu_custom_call.1} parent=1 // pred_region
      %16 = vsyncadd [#allocation4], 0
      %s18 = sshll.u32 %s0, 4
      %s19 = int_to_ptr.hbm [resolvable:$true] %s18
      %s20 = sshll.u32 [#allocation3], 4
      %s21 = int_to_ptr.vmem [resolvable:$true] %s20
      %23 = dma.hbm_to_vmem [thread:$0]  %s19, 256, %s21, [#allocation4]
    $region5: #{tpu_custom_call.1} parent=1 // pred_fallthru
      _
    // Predicated region
    $region6: #{tpu_custom_call.1} parent=1 // pred_check
      _
    $region7: #{tpu_custom_call.1} parent=1 // pred_check_branch
      %25 = sbr.rel (0) target = $region9
    $region8: #{tpu_custom_call.1} parent=1 // pred_region
      _
    $region9: #{tpu_custom_call.1} parent=1 // pred_fallthru
      _
    // Predicated region
    $region10: #{tpu_custom_call.1} parent=1 // pred_check
      _
    $region11: #{tpu_custom_call.1} parent=1 // pred_check_branch
      %27 = sbr.rel (0) target = $region13
    $region12: #{tpu_custom_call.1} parent=1 // pred_region
      _
    $region13: #{tpu_custom_call.1} parent=1 // pred_fallthru
      _
    // Predicated region
    $region14: #{tpu_custom_call.1} parent=1 // pred_check
      _
    $region15: #{tpu_custom_call.1} parent=1 // pred_check_branch
      %29 = sbr.rel (0) target = $region17
    $region16: #{tpu_custom_call.1} parent=1 // pred_region
      _
    $region17: #{tpu_custom_call.1} parent=1 // pred_fallthru
      _
    // Predicated region
    $region18: #{tpu_custom_call.1} parent=1 // pred_check
      _
    $region19: #{tpu_custom_call.1} parent=1 // pred_check_branch
      %31 = sbr.rel (0) target = $region21
    $region20: #{tpu_custom_call.1} parent=1 // pred_region
      _
    $region21: #{tpu_custom_call.1} parent=1 // pred_fallthru
      _
    // Predicated region
    $region22: #{tpu_custom_call.1} parent=1 // pred_check
      _
    $region23: #{tpu_custom_call.1} parent=1 // pred_check_branch
      %33 = sbr.rel (0) target = $region25
    $region24: #{tpu_custom_call.1} parent=1 // pred_region
      _
    $region25: #{tpu_custom_call.1} parent=1 // pred_fallthru
      _
    // Predicated region
    $region26: #{tpu_custom_call.1} parent=1 // pred_check
      _
    $region27: #{tpu_custom_call.1} parent=1 // pred_check_branch
      %35 = sbr.rel (0) target = $region29
    $region28: #{tpu_custom_call.1} parent=1 // pred_region
      %37 = dma.done [#allocation4], 256
    $region29: #{tpu_custom_call.1} parent=1 // pred_fallthru
      _
    %p38 = scmp.eq.s32.totalorder 0, 0
    // Predicated region
    $region30: #{tpu_custom_call.1} parent=1 // pred_check
      %p39 = pneg %p38
    $region31: #{tpu_custom_call.1} parent=1 // pred_check_branch
      %41 = sbr.rel (%p39) target = $region33
    $region32: #{tpu_custom_call.1} parent=1 // pred_region
      %vm42 = vcmask 7168
      %43 = vst.msk [vmem:[#allocation2] sm:$0xff] %vm42, 0.0
    $region33: #{tpu_custom_call.1} parent=1 // pred_fallthru
      _
    %v44 = vld [vmem:[#allocation2] sm:$0xff]
    %v45 = vld [vmem:[#allocation3] sm:$0xff]
    %v46 = vld [vmem:[#allocation3 + $0x8] sm:$0xff]
    %v47 = vadd.f32 %v45, %v46
    %48 = vadd.xlane.f32.xlu0 %v47
    %v49 = vpop.xlane.xlu0 %48
    %v50 = vadd.f32 %v44, %v49
    %vm51 = vcmask 7168
    %52 = vst.msk [vmem:[#allocation2] sm:$0xff] %vm51, %v50
    // Predicated region
    $region34: #{tpu_custom_call.1} parent=1 // pred_check
      %p53 = pneg %p38
    $region35: #{tpu_custom_call.1} parent=1 // pred_check_branch
      %55 = sbr.rel (%p53) target = $region37
    $region36: #{tpu_custom_call.1} parent=1 // pred_region
      %v56 = vld [vmem:[#allocation2] sm:$0xff]
      %v57 = vld [vmem:[%s1] sm:$0x3]
      %v58 = vld [vmem:[%s2] sm:$0xff]
      %60 = vset.pattern.permute.xlu0 0
      %61 = vperm.xlu0 %60, %v56
      %v62 = vpop.permute.xlu0 %61
      %v64 = vmul.f32 %v62, %v58
      %v65 = vld [vmem:[%s3] sm:$0x1]
      %v67 = vperm.slane %v65, 0
      %vm69 = vcmask 64512
      %v71 = vsel %vm69, %v57, 0
      %73 = vmatpush.msra.mxu0 0.0
      %74 = vmatpush.msra.mxu0 0.0
      %75 = vmatpush.msra.mxu0 0.0
      %76 = vmatpush.msra.mxu0 0.0
      %77 = vmatpush.msra.mxu0 0.0
      %78 = vmatpush.msra.mxu0 0.0
      %79 = vmatpush.msra.mxu0 0.0
      %80 = vmatpush.msra.mxu0 0.0
      %81 = vmatpush.msra.mxu0 0.0
      %82 = vmatpush.msra.mxu0 0.0
      %83 = vmatpush.msra.mxu0 0.0
      %84 = vmatpush.msra.mxu0 0.0
      %85 = vmatpush.msra.mxu0 0.0
      %86 = vmatpush.msra.mxu0 0.0
      %87 = vmatpush.msra.mxu0 0.0
      %88 = vmatpush.msra.mxu0 %v64
      %89 = vmatmul.f32.gmra.mxu0 %v71
      %v90 = vpop.f32.mrf.mxu0
      %v91 = vadd.f32 %v67, %v90
      %92 = vdwg.mxu0
      %v93 = vmax.f32 %v91, 0.0
      %v94 = vld [vmem:[%s4] sm:$0xf]
      %v95 = vld [vmem:[%s5] sm:$0x1]
      %v97 = vperm.slane %v95, 0
      %vm99 = vcmask 31744
      %v101 = vsel %vm99, %v93, 0
      %vm103 = vcmask 1043456
      %v105 = vsel %vm103, %v94, 0
      %107 = vmatpush.msra.mxu0 0.0
      %108 = vmatpush.msra.mxu0 0.0
      %109 = vmatpush.msra.mxu0 0.0
      %110 = vmatpush.msra.mxu0 0.0
      %111 = vmatpush.msra.mxu0 0.0
      %112 = vmatpush.msra.mxu0 0.0
      %113 = vmatpush.msra.mxu0 0.0
      %114 = vmatpush.msra.mxu0 0.0
      %115 = vmatpush.msra.mxu0 0.0
      %116 = vmatpush.msra.mxu0 0.0
      %117 = vmatpush.msra.mxu0 0.0
      %118 = vmatpush.msra.mxu0 0.0
      %119 = vmatpush.msra.mxu0 0.0
      %120 = vmatpush.msra.mxu0 0.0
      %121 = vmatpush.msra.mxu0 0.0
      %122 = vmatpush.msra.mxu0 %v105
      %123 = vmatmul.f32.gmra.mxu0 %v101
      %v124 = vpop.f32.mrf.mxu0
      %v125 = vadd.f32 %v97, %v124
      %126 = vdwg.mxu0
      %vm127 = vcmp.gt.f32.partialorder %v125, 0.0
      %v128 = vsel %vm127, 1, 0
      %v129 = vcvt.s32.f32 %v128
      %vm130 = vcmask 58368
      %131 = vst.msk [vmem:[#allocation6] sm:$0x3] %vm130, %v129
    $region37: #{tpu_custom_call.1} parent=1 // pred_fallthru
      _
    // Predicated region
    $region38: #{tpu_custom_call.1} parent=1 // pred_check
      _
    $region39: #{tpu_custom_call.1} parent=1 // pred_check_branch
      %133 = sbr.rel (0) target = $region41
    $region40: #{tpu_custom_call.1} parent=1 // pred_region
      %135 = vsyncadd [#allocation5], 0
      %s137 = sshll.u32 [#allocation6], 4
      %s138 = int_to_ptr.vmem [resolvable:$true] %s137
      %s139 = sshll.u32 %s6, 4
      %s140 = int_to_ptr.hbm [resolvable:$true] %s139
      %142 = dma.vmem_to_hbm [thread:$0]  %s138, 32, %s140, [#allocation5]
    $region41: #{tpu_custom_call.1} parent=1 // pred_fallthru
      _
    // Predicated region
    $region42: #{tpu_custom_call.1} parent=1 // pred_check
      _
    $region43: #{tpu_custom_call.1} parent=1 // pred_check_branch
      %144 = sbr.rel (0) target = $region45
    $region44: #{tpu_custom_call.1} parent=1 // pred_region
      %146 = dma.done [#allocation5], 32
    $region45: #{tpu_custom_call.1} parent=1 // pred_fallthru
      _
    %147 = vsyncpa [#allocation4], 1
    %148 = vsyncpa [#allocation5], 1

</llo_original>
